<compile_context>
chip_gen: v5e
topology: v5e:2x2
jax: 0.10.0
libtpu: 0.0.40
codegen_flags: <defaults>
</compile_context>

<pallas_src>
import functools

import jax
import jax.numpy as jnp
from jax import lax
from jax.experimental import pallas as pl
from jax.experimental.pallas import tpu as pltpu

LANE = 128  # TPU lane width; small feature/class dims are zero-padded to this.


def _round_up(v, m):
    return (v + m - 1) // m * m


# ---------------------------------------------------------------------------
# Kernels (one fused kernel per GraphConvolution layer)
# ---------------------------------------------------------------------------
def gc_relu_kernel(adj_ref, x_ref, w_ref, b_ref, out_ref):
    """h_tile = relu(adj_tile @ (X @ W) + b).

    X (N, f_pad) and W (f_pad, h_pad) are VMEM-resident; the transform is
    recomputed per row tile and hides under the adjacency-tile DMA.
    """
    s = jnp.dot(
        x_ref[...], w_ref[...], preferred_element_type=jnp.float32
    ).astype(jnp.bfloat16)
    z = jnp.dot(adj_ref[...], s, preferred_element_type=jnp.float32)
    z = z + b_ref[...]
    out_ref[...] = jnp.maximum(z, 0.0).astype(out_ref.dtype)


def gc_logsoftmax_kernel(adj_ref, h_ref, w_ref, b_ref, out_ref, *, nclass):
    """out_tile = log_softmax(adj_tile @ (H @ W) + b) over the real class lanes."""
    s = jnp.dot(
        h_ref[...], w_ref[...], preferred_element_type=jnp.float32
    ).astype(jnp.bfloat16)
    z = jnp.dot(adj_ref[...], s, preferred_element_type=jnp.float32)
    z = z + b_ref[...]
    # Class dim is zero-padded to a lane-dense width; mask padding to -inf so
    # exp(0) terms cannot corrupt the max / logsumexp.
    col = lax.broadcasted_iota(jnp.int32, z.shape, dimension=1)
    z = jnp.where(col < nclass, z, -jnp.inf)
    m = jnp.max(z, axis=1, keepdims=True)
    sh = z - m
    lse = jnp.log(jnp.sum(jnp.exp(sh), axis=1, keepdims=True))
    out_ref[...] = (sh - lse).astype(out_ref.dtype)


# ---------------------------------------------------------------------------
# Wrapper
# ---------------------------------------------------------------------------
def gcn_forward(x, adj, w1, b1, w2, b2, *, block_rows=128):
    n, nfeat = x.shape
    nhid = w1.shape[1]
    nclass = w2.shape[1]

    f_pad = _round_up(nfeat, LANE)
    h_pad = _round_up(nhid, LANE)
    c_pad = _round_up(nclass, LANE)
    tm = min(block_rows, n)
    assert n % tm == 0, "demo keeps N a multiple of the row tile"
    grid = (n // tm,)

    bf = jnp.bfloat16
    # Host-side zero padding is numerically exact for all layers.
    x_p = jnp.zeros((n, f_pad), bf).at[:, :nfeat].set(x.astype(bf))
    adj_b = adj.astype(bf)
    w1_p = jnp.zeros((f_pad, h_pad), bf).at[:nfeat, :nhid].set(w1.astype(bf))
    b1_p = jnp.zeros((1, h_pad), jnp.float32).at[:, :nhid].set(b1)
    w2_p = jnp.zeros((h_pad, c_pad), bf).at[:nhid, :nclass].set(w2.astype(bf))
    b2_p = jnp.zeros((1, c_pad), jnp.float32).at[:, :nclass].set(b2)

    cparams = pltpu.CompilerParams(
        dimension_semantics=("parallel",),   # megacore sharding on v7x
        vmem_limit_bytes=48 << 20,           # headroom for larger N / row tiles
    )

    def gc_layer(kernel_fn, feats, w, bias, out_cols, out_dtype, transcendentals=0):
        k = feats.shape[1]
        out_bytes = n * out_cols * jnp.dtype(out_dtype).itemsize
        cost = pl.CostEstimate(
            flops=int(2 * n * n * out_cols + 2 * n * k * out_cols * len(range(grid[0]))),
            transcendentals=int(transcendentals),
            bytes_accessed=int(
                n * n * 2 + n * k * 2 + k * out_cols * 2 + out_cols * 4 + out_bytes
            ),
        )
        return pl.pallas_call(
            kernel_fn,
            out_shape=jax.ShapeDtypeStruct((n, out_cols), out_dtype),
            grid_spec=pltpu.PrefetchScalarGridSpec(
                num_scalar_prefetch=0,
                grid=grid,
                in_specs=[
                    pl.BlockSpec((tm, n), lambda i: (i, 0)),          # adj row tile (streamed)
                    pl.BlockSpec((n, k), lambda i: (0, 0)),           # node features resident
                    pl.BlockSpec((k, out_cols), lambda i: (0, 0)),    # weights resident
                    pl.BlockSpec((1, out_cols), lambda i: (0, 0)),    # bias resident
                ],
                out_specs=pl.BlockSpec((tm, out_cols), lambda i: (i, 0)),
            ),
            compiler_params=cparams,
            cost_estimate=cost,
        )(adj_b, feats, w, bias)

    # ---- GraphConvolution 1 + ReLU  (fused transform + aggregate + bias + relu)
    h = gc_layer(gc_relu_kernel, x_p, w1_p, b1_p, h_pad, bf)            # (N, h_pad) bf16

    # TODO(synk): F.dropout(training=self.training) — identity at inference.
    # A training-mode mask would use pltpu.prng_seed + pltpu.prng_random_bits.

    # ---- GraphConvolution 2 + log_softmax (fused)
    logp_pad = gc_layer(
        functools.partial(gc_logsoftmax_kernel, nclass=nclass),
        h, w2_p, b2_p, c_pad, jnp.float32,
        transcendentals=n * c_pad,
    )                                                                    # (N, c_pad) f32
    return logp_pad[:, :nclass]


# ---------------------------------------------------------------------------
# Reference (mirrors the kernel's bf16 casts so the check is tight)
# ---------------------------------------------------------------------------
def reference_forward(x, adj, w1, b1, w2, b2):
    bf = jnp.bfloat16
    xb, ab = x.astype(bf), adj.astype(bf)
    s1 = jnp.dot(xb, w1.astype(bf), preferred_element_type=jnp.float32)
    h = jnp.maximum(
        jnp.dot(ab, s1.astype(bf), preferred_element_type=jnp.float32) + b1, 0.0
    )
    s2 = jnp.dot(h.astype(bf), w2.astype(bf), preferred_element_type=jnp.float32)
    z = jnp.dot(ab, s2.astype(bf), preferred_element_type=jnp.float32) + b2
    return jax.nn.log_softmax(z, axis=1)


if __name__ == "__main__":
    # Deterministic small problem: N=256 nodes, nfeat=32, nhid=16, nclass=8.
    N, nfeat, nhid, nclass = 256, 32, 16, 8
    key = jax.random.PRNGKey(0)
    kx, ka, kw1, kb1, kw2, kb2 = jax.random.split(key, 6)

    x = jax.random.normal(kx, (N, nfeat), dtype=jnp.float32)

    # Symmetric, row-normalized dense adjacency with self-loops.
    a = (jax.random.uniform(ka, (N, N)) < 0.05).astype(jnp.float32)
    a = jnp.maximum(a, a.T) + jnp.eye(N, dtype=jnp.float32)
    deg = jnp.sum(a, axis=1, keepdims=True)
    adj = a / deg

    # GraphConvolution weight init (uniform, like pygcn's reset_parameters).
    bound1 = 1.0 / jnp.sqrt(jnp.float32(nhid))
    w1 = jax.random.uniform(kw1, (nfeat, nhid), jnp.float32, -bound1, bound1)
    b1 = jax.random.uniform(kb1, (1, nhid), jnp.float32, -bound1, bound1)
    bound2 = 1.0 / jnp.sqrt(jnp.float32(nclass))
    w2 = jax.random.uniform(kw2, (nhid, nclass), jnp.float32, -bound2, bound2)
    b2 = jax.random.uniform(kb2, (1, nclass), jnp.float32, -bound2, bound2)

    out = gcn_forward(x, adj, w1, b1, w2, b2)
    jax.block_until_ready(out)

    ref = reference_forward(x, adj, w1, b1, w2, b2)
    assert out.shape == (N, nclass)
    assert jnp.allclose(out, ref, atol=2e-2, rtol=2e-2), "mismatch vs JAX reference"
    # Rows of log_softmax must sum (in prob space) to ~1.
    assert jnp.allclose(jnp.sum(jnp.exp(out), axis=1), 1.0, atol=1e-2)

    print("KERNEL_OK")
</pallas_src>

<mosaic_0001>
module attributes {stable_mosaic.version = 11 : i64} {
  func.func @gc_relu_kernel(%arg0: i32, %arg1: memref<128x256xbf16, #tpu.memory_space<vmem>>, %arg2: memref<256x128xbf16, #tpu.memory_space<vmem>>, %arg3: memref<128x128xbf16, #tpu.memory_space<vmem>>, %arg4: memref<1x128xf32, #tpu.memory_space<vmem>>, %arg5: memref<128x128xbf16, #tpu.memory_space<vmem>>) attributes {dimension_semantics = [#tpu.dimension_semantics<parallel>], iteration_bounds = array<i64: 2>, scalar_prefetch = 0 : i64, scratch_operands = 0 : i64, tpu.core_type = #tpu.core_type<tc>, window_params = [{transform_indices = @transform_0, window_bounds = array<i64: 128, 256>}, {pipeline_mode = #tpu.pipeline_mode<synchronous>, transform_indices = @transform_1, window_bounds = array<i64: 256, 128>}, {pipeline_mode = #tpu.pipeline_mode<synchronous>, transform_indices = @transform_2, window_bounds = array<i64: 128, 128>}, {pipeline_mode = #tpu.pipeline_mode<synchronous>, transform_indices = @transform_3, window_bounds = array<i64: 1, 128>}, {transform_indices = @transform_4, window_bounds = array<i64: 128, 128>}]} {
    %c0 = arith.constant 0 : index
    %c0_0 = arith.constant 0 : index
    %0 = vector.load %arg2[%c0, %c0_0] : memref<256x128xbf16, #tpu.memory_space<vmem>>, vector<256x128xbf16>
    %c0_1 = arith.constant 0 : index
    %c0_2 = arith.constant 0 : index
    %1 = vector.load %arg3[%c0_1, %c0_2] : memref<128x128xbf16, #tpu.memory_space<vmem>>, vector<128x128xbf16>
    %cst = arith.constant dense<0.000000e+00> : vector<256x128xf32>
    %2 = tpu.matmul %0, %1, %cst {dimension_numbers = #tpu.dot_dimension_numbers<[1], [0], [0], [1], [0, 0, 1, 1], [], []>} : vector<256x128xbf16>, vector<128x128xbf16>, vector<256x128xf32> -> vector<256x128xf32>
    %3 = arith.truncf %2 : vector<256x128xf32> to vector<256x128xbf16>
    %c0_3 = arith.constant 0 : index
    %c0_4 = arith.constant 0 : index
    %4 = vector.load %arg1[%c0_3, %c0_4] : memref<128x256xbf16, #tpu.memory_space<vmem>>, vector<128x256xbf16>
    %cst_5 = arith.constant dense<0.000000e+00> : vector<128x128xf32>
    %5 = tpu.matmul %4, %3, %cst_5 {dimension_numbers = #tpu.dot_dimension_numbers<[1], [0], [0], [1], [0, 0, 1, 1], [], []>} : vector<128x256xbf16>, vector<256x128xbf16>, vector<128x128xf32> -> vector<128x128xf32>
    %c0_6 = arith.constant 0 : index
    %c0_7 = arith.constant 0 : index
    %6 = vector.load %arg4[%c0_6, %c0_7] : memref<1x128xf32, #tpu.memory_space<vmem>>, vector<1x128xf32>
    %7 = vector.broadcast %6 : vector<1x128xf32> to vector<128x128xf32>
    %8 = arith.addf %5, %7 : vector<128x128xf32>
    %cst_8 = arith.constant 0.000000e+00 : f32
    %9 = vector.broadcast %cst_8 : f32 to vector<128x128xf32>
    %10 = arith.maximumf %8, %9 : vector<128x128xf32>
    %11 = arith.truncf %10 : vector<128x128xf32> to vector<128x128xbf16>
    %c0_9 = arith.constant 0 : index
    %c0_10 = arith.constant 0 : index
    %12 = vector.load %arg5[%c0_9, %c0_10] : memref<128x128xbf16, #tpu.memory_space<vmem>>, vector<128x128xbf16>
    tpu.vector_store %arg5[%c0_9, %c0_10], %11 {strides = array<i32>} : memref<128x128xbf16, #tpu.memory_space<vmem>>, vector<128x128xbf16>,
    return
  }
  func.func @transform_0(%arg0: i32) -> (i32, i32) {
    %c0_i32 = arith.constant 0 : i32
    %c0_i32_0 = arith.constant 0 : i32
    return %arg0, %c0_i32 : i32, i32
  }
  func.func @transform_1(%arg0: i32) -> (i32, i32) {
    %c0_i32 = arith.constant 0 : i32
    %c0_i32_0 = arith.constant 0 : i32
    %c0_i32_1 = arith.constant 0 : i32
    return %c0_i32, %c0_i32_0 : i32, i32
  }
  func.func @transform_2(%arg0: i32) -> (i32, i32) {
    %c0_i32 = arith.constant 0 : i32
    %c0_i32_0 = arith.constant 0 : i32
    %c0_i32_1 = arith.constant 0 : i32
    return %c0_i32, %c0_i32_0 : i32, i32
  }
  func.func @transform_3(%arg0: i32) -> (i32, i32) {
    %c0_i32 = arith.constant 0 : i32
    %c0_i32_0 = arith.constant 0 : i32
    %c0_i32_1 = arith.constant 0 : i32
    return %c0_i32, %c0_i32_0 : i32, i32
  }
  func.func @transform_4(%arg0: i32) -> (i32, i32) {
    %c0_i32 = arith.constant 0 : i32
    %c0_i32_0 = arith.constant 0 : i32
    return %arg0, %c0_i32 : i32, i32
  }
}

</mosaic_0001>

<llo_original>
// kernel: tpu_custom_call.1
$region0: #{tpu_custom_call.1}
  #allocation0 [shape = 'u32[]', space=smem, size = 0x4, offset = 0x4, fixed_abs, tag = 'smem constant byte address 0x4 - core index']
  #allocation1 [shape = 'u32[72,128]{1,0:T(1,128)}', space=vmem, size = 0x9000, scoped, tag = 'internal scratch']
  %s0 = inlined_call_operand.hbm [shape: bf16[256,256], index: 0, kind: input, shape index: {}]
  %s1 = inlined_call_operand.hbm [shape: bf16[256,128], index: 1, kind: input, shape index: {}]
  %s2 = inlined_call_operand.hbm [shape: bf16[128,128], index: 2, kind: input, shape index: {}]
  %s3 = inlined_call_operand.vmem [shape: f32[1,128], index: 3, kind: input, shape index: {}]
  %s4 = inlined_call_operand.hbm [shape: bf16[256,128], index: 4, kind: output, shape index: {}]
  %s5 = sld [smem:[#allocation0]]
  $region61: #{tpu_custom_call.1} parent=0
    _
  %s7 = ssub.s32 1, %s5
  %s8 = scalar_select 0, %s7, %s5
  $region1: #{tpu_custom_call.1} parent=0
    #allocation2 [shape = 'u8[131072]{0}', space=vmem, size = 0x20000, scoped, tag = 'input window, operand 0']
    #allocation3 [shape = 's32[2]{0}', space=sflag, size = 0x8, scoped, tag = 'scoped memory for tpu_custom_call.1']
    #allocation4 [shape = 's32[2]{0}', space=sflag, size = 0x8, scoped, tag = 'scoped memory for tpu_custom_call.1']
    #allocation5 [shape = 'u8[65536]{0}', space=vmem, size = 0x10000, scoped, tag = 'input window, operand 1, single buffered']
    #allocation6 [shape = 's32[1]{0}', space=sflag, size = 0x4, scoped, tag = 'scoped memory for tpu_custom_call.1']
    #allocation7 [shape = 'u8[32768]{0}', space=vmem, size = 0x8000, scoped, tag = 'input window, operand 2, single buffered']
    #allocation8 [shape = 'u8[65536]{0}', space=vmem, size = 0x10000, scoped, tag = 'output window, operand 0']
    %9 = vsyncpa [#allocation3], 0
    %s10 = scalar_lea.sflag [#allocation3], 1
    %11 = vsyncpa %s10, 0
    %12 = vsyncpa [#allocation6], 0
    %13 = vsyncpa [#allocation4], 0
    %s14 = scalar_lea.sflag [#allocation4], 1
    %15 = vsyncpa %s14, 0
    loop: start=0, step=1, limit=4
    $region2: #{tpu_custom_call.1} parent=1 // loop_pre_header
      _
    $region3: #{tpu_custom_call.1} parent=1 // loop_header
      %s17 = sphi 0, %s21
      %p18 = scmp.ge.s32.totalorder %s17, 4
      %s27 = sphi 0, %s29
      %s30 = sphi 0, %s27
      %s31 = sphi 0, %s30
      %s47 = sphi 0, %s31
      %s51 = sphi 0, %s51
      %s53 = sphi 0, %s51
      %s54 = sphi 0, %s53
      %s68 = sphi 0, %s54
      %s72 = sphi 0, %s72
      %s74 = sphi 0, %s72
      %s75 = sphi 0, %s74
      %s89 = sphi 0, %s75
      %s93 = sphi 0, %s93
      %s95 = sphi 0, %s93
      %s96 = sphi 0, %s95
      %s110 = sphi 0, %s96
      %s116 = sphi 0, %s118
      %s119 = sphi 0, %s116
      %s120 = sphi 0, %s119
      %s136 = sphi 0, %s120
    $region4: #{tpu_custom_call.1} parent=1 // loop_header_branch
      %20 = sbr.rel (%p18) target = $region8
    $region5: #{tpu_custom_call.1} parent=1 // loop_body
      %s22 = ssub.s32 %s17, 1
      %s23 = ssub.s32 %s17, 2
      %s24 = sadd.s32 %s17, 1
      %s25 = ssub.s32 %s17, %s24
      %p26 = scmp.eq.s32.totalorder %s25, 0
      %s28 = sadd.s32 %s27, 1
      %s29 = scalar_select %p26, %s27, %s28
      %p32 = pneg %p26
      %p33 = scmp.eq.s32.totalorder %s17, 1
      %p34 = por %p32, %p33
      %p35 = scmp.ne.s32.totalorder %s27, %s30
      %p36 = scmp.eq.s32.totalorder %s17, 0
      %p37 = por %p35, %p36
      %p38 = scmp.ne.s32.totalorder %s27, %s30
      %p39 = scmp.eq.s32.totalorder %s22, 1
      %p40 = por %p38, %p39
      %p41 = scmp.ne.s32.totalorder %s30, %s31
      %p42 = scmp.eq.s32.totalorder %s22, 0
      %p43 = por %p41, %p42
      %p44 = scmp.ne.s32.totalorder %s30, %s31
      %p45 = scmp.eq.s32.totalorder %s23, 1
      %p46 = por %p44, %p45
      %p48 = scmp.ne.s32.totalorder %s31, %s47
      %p49 = scmp.eq.s32.totalorder %s23, 0
      %p50 = por %p48, %p49
      %s52 = sadd.s32 %s51, 1
      %p55 = scmp.eq.s32.totalorder %s17, 1
      %p56 = scmp.ne.s32.totalorder %s51, %s53
      %p57 = scmp.eq.s32.totalorder %s17, 0
      %p58 = por %p56, %p57
      %p59 = scmp.ne.s32.totalorder %s51, %s53
      %p60 = scmp.eq.s32.totalorder %s22, 1
      %p61 = por %p59, %p60
      %p62 = scmp.ne.s32.totalorder %s53, %s54
      %p63 = scmp.eq.s32.totalorder %s22, 0
      %p64 = por %p62, %p63
      %p65 = scmp.ne.s32.totalorder %s53, %s54
      %p66 = scmp.eq.s32.totalorder %s23, 1
      %p67 = por %p65, %p66
      %p69 = scmp.ne.s32.totalorder %s54, %s68
      %p70 = scmp.eq.s32.totalorder %s23, 0
      %p71 = por %p69, %p70
      %s73 = sadd.s32 %s72, 1
      %p76 = scmp.eq.s32.totalorder %s17, 1
      %p77 = scmp.ne.s32.totalorder %s72, %s74
      %p78 = scmp.eq.s32.totalorder %s17, 0
      %p79 = por %p77, %p78
      %p80 = scmp.ne.s32.totalorder %s72, %s74
      %p81 = scmp.eq.s32.totalorder %s22, 1
      %p82 = por %p80, %p81
      %p83 = scmp.ne.s32.totalorder %s74, %s75
      %p84 = scmp.eq.s32.totalorder %s22, 0
      %p85 = por %p83, %p84
      %p86 = scmp.ne.s32.totalorder %s74, %s75
      %p87 = scmp.eq.s32.totalorder %s23, 1
      %p88 = por %p86, %p87
      %p90 = scmp.ne.s32.totalorder %s75, %s89
      %p91 = scmp.eq.s32.totalorder %s23, 0
      %p92 = por %p90, %p91
      %s94 = sadd.s32 %s93, 1
      %p97 = scmp.eq.s32.totalorder %s17, 1
      %p98 = scmp.ne.s32.totalorder %s93, %s95
      %p99 = scmp.eq.s32.totalorder %s17, 0
      %p100 = por %p98, %p99
      %p101 = scmp.ne.s32.totalorder %s93, %s95
      %p102 = scmp.eq.s32.totalorder %s22, 1
      %p103 = por %p101, %p102
      %p104 = scmp.ne.s32.totalorder %s95, %s96
      %p105 = scmp.eq.s32.totalorder %s22, 0
      %p106 = por %p104, %p105
      %p107 = scmp.ne.s32.totalorder %s95, %s96
      %p108 = scmp.eq.s32.totalorder %s23, 1
      %p109 = por %p107, %p108
      %p111 = scmp.ne.s32.totalorder %s96, %s110
      %p112 = scmp.eq.s32.totalorder %s23, 0
      %p113 = por %p111, %p112
      %s114 = ssub.s32 %s17, %s24
      %p115 = scmp.eq.s32.totalorder %s114, 0
      %s117 = sadd.s32 %s116, 1
      %s118 = scalar_select %p115, %s116, %s117
      %p121 = pneg %p115
      %p122 = scmp.eq.s32.totalorder %s17, 1
      %p123 = por %p121, %p122
      %p124 = scmp.ne.s32.totalorder %s116, %s119
      %p125 = scmp.eq.s32.totalorder %s17, 0
      %p126 = por %p124, %p125
      %p127 = scmp.ne.s32.totalorder %s116, %s119
      %p128 = scmp.eq.s32.totalorder %s22, 1
      %p129 = por %p127, %p128
      %p130 = scmp.ne.s32.totalorder %s119, %s120
      %p131 = scmp.eq.s32.totalorder %s22, 0
      %p132 = por %p130, %p131
      %p133 = scmp.ne.s32.totalorder %s119, %s120
      %p134 = scmp.eq.s32.totalorder %s23, 1
      %p135 = por %p133, %p134
      %p137 = scmp.ne.s32.totalorder %s120, %s136
      %p138 = scmp.eq.s32.totalorder %s23, 0
      %p139 = por %p137, %p138
      %p140 = scmp.le.s32.totalorder 1, %s17
      %p141 = scmp.lt.s32.totalorder %s17, 3
      %p142 = pnand %p140, %p141
      %p143 = pneg %p142
      // Predicated region
      $region9: #{tpu_custom_call.1} parent=5 // pred_check
        _
      $region10: #{tpu_custom_call.1} parent=5 // pred_check_branch
        %145 = sbr.rel (%p142) target = $region12
      $region11: #{tpu_custom_call.1} parent=5 // pred_region
        %s146 = ssub.s32 %s17, 1
        // Predicated region
        $region13: #{tpu_custom_call.1} parent=11 // pred_check
          %p147 = pneg %p64
        $region14: #{tpu_custom_call.1} parent=11 // pred_check_branch
          %149 = sbr.rel (%p147) target = $region16
        $region15: #{tpu_custom_call.1} parent=11 // pred_region
          %151 = vsyncadd [#allocation6], 0
          %s152 = sshll.u32 %s1, 4
          %s153 = int_to_ptr.hbm [resolvable:$true] %s152
          %s154 = sshll.u32 [#allocation5], 4
          %s155 = int_to_ptr.vmem [resolvable:$true] %s154
          %160 = dma.hbm_to_vmem [thread:$0]  %s153, 2048, %s155, [#allocation6], 64, 64, 4
        $region16: #{tpu_custom_call.1} parent=11 // pred_fallthru
          _
        // Predicated region
        $region17: #{tpu_custom_call.1} parent=11 // pred_check
          %p161 = pneg %p85
        $region18: #{tpu_custom_call.1} parent=11 // pred_check_branch
          %163 = sbr.rel (%p161) target = $region20
        $region19: #{tpu_custom_call.1} parent=11 // pred_region
          %165 = vsyncadd [#allocation6], 0
          %s166 = sshll.u32 %s2, 4
          %s167 = int_to_ptr.hbm [resolvable:$true] %s166
          %s168 = sshll.u32 [#allocation7], 4
          %s169 = int_to_ptr.vmem [resolvable:$true] %s168
          %174 = dma.hbm_to_vmem [thread:$0]  %s167, 1024, %s169, [#allocation6], 64, 64, 4
        $region20: #{tpu_custom_call.1} parent=11 // pred_fallthru
          _
        // Predicated region
        $region21: #{tpu_custom_call.1} parent=11 // pred_check
          %p175 = pneg %p106
        $region22: #{tpu_custom_call.1} parent=11 // pred_check_branch
          %177 = sbr.rel (%p175) target = $region24
        $region23: #{tpu_custom_call.1} parent=11 // pred_region
          _
        $region24: #{tpu_custom_call.1} parent=11 // pred_fallthru
          _
      $region12: #{tpu_custom_call.1} parent=5 // pred_fallthru
        _
      %p178 = scmp.lt.s32.totalorder %s17, 2
      // Predicated region
      $region25: #{tpu_custom_call.1} parent=5 // pred_check
        %p179 = pneg %p178
      $region26: #{tpu_custom_call.1} parent=5 // pred_check_branch
        %181 = sbr.rel (%p179) target = $region28
      $region27: #{tpu_custom_call.1} parent=5 // pred_region
        // Predicated region
        $region29: #{tpu_custom_call.1} parent=27 // pred_check
          %p182 = pneg %p37
        $region30: #{tpu_custom_call.1} parent=27 // pred_check_branch
          %184 = sbr.rel (%p182) target = $region32
        $region31: #{tpu_custom_call.1} parent=27 // pred_region
          %s185 = sand.u32 %s27, 1
          %s186 = scalar_lea.sflag [#allocation3], %s185
          %s187 = sand.u32 %s27, 1
          %s188 = smul.addr %s187, 128
          %s189 = scalar_lea.vmem [#allocation2], %s188
          %s190 = smul.u32 16, %s17
          %192 = vsyncadd %s186, 0
          %s193 = smul.addr %s190, 2
          %s194 = smul.addr %s193, 4
          %s195 = scalar_lea.hbm %s0, %s194
          %s196 = sshll.u32 %s195, 4
          %s197 = int_to_ptr.hbm [resolvable:$true] %s196
          %s198 = sshll.u32 %s189, 4
          %s199 = int_to_ptr.vmem [resolvable:$true] %s198
          %204 = dma.hbm_to_vmem [thread:$0]  %s197, 2048, %s199, %s186, 128, 128, 8
        $region32: #{tpu_custom_call.1} parent=27 // pred_fallthru
          _
      $region28: #{tpu_custom_call.1} parent=5 // pred_fallthru
        _
      %p205 = scmp.le.s32.totalorder 1, %s17
      %p206 = scmp.lt.s32.totalorder %s17, 3
      %p207 = pnand %p205, %p206
      %p208 = pneg %p207
      // Predicated region
      $region33: #{tpu_custom_call.1} parent=5 // pred_check
        _
      $region34: #{tpu_custom_call.1} parent=5 // pred_check_branch
        %210 = sbr.rel (%p207) target = $region36
      $region35: #{tpu_custom_call.1} parent=5 // pred_region
        %s211 = ssub.s32 %s17, 1
        %s212 = sand.u32 %s30, 1
        %s213 = scalar_lea.sflag [#allocation3], %s212
        %s214 = sand.u32 %s30, 1
        %s215 = smul.addr %s214, 128
        %s216 = scalar_lea.vmem [#allocation2], %s215
        // Predicated region
        $region37: #{tpu_custom_call.1} parent=35 // pred_check
          %p217 = pneg %p43
        $region38: #{tpu_custom_call.1} parent=35 // pred_check_branch
          %219 = sbr.rel (%p217) target = $region40
        $region39: #{tpu_custom_call.1} parent=35 // pred_region
          %221 = dma.done %s213, 2048
        $region40: #{tpu_custom_call.1} parent=35 // pred_fallthru
          _
        // Predicated region
        $region41: #{tpu_custom_call.1} parent=35 // pred_check
          %p222 = pneg %p64
        $region42: #{tpu_custom_call.1} parent=35 // pred_check_branch
          %224 = sbr.rel (%p222) target = $region44
        $region43: #{tpu_custom_call.1} parent=35 // pred_region
          %226 = dma.done [#allocation6], 2048
        $region44: #{tpu_custom_call.1} parent=35 // pred_fallthru
          _
        // Predicated region
        $region45: #{tpu_custom_call.1} parent=35 // pred_check
          %p227 = pneg %p85
        $region46: #{tpu_custom_call.1} parent=35 // pred_check_branch
          %229 = sbr.rel (%p227) target = $region48
        $region47: #{tpu_custom_call.1} parent=35 // pred_region
          %231 = dma.done [#allocation6], 1024
        $region48: #{tpu_custom_call.1} parent=35 // pred_fallthru
          _
        %s232 = sand.u32 %s30, 1
        %s233 = scalar_lea.sflag [#allocation3], %s232
        %s234 = sand.u32 %s30, 1
        %s235 = smul.addr %s234, 128
        %s236 = scalar_lea.vmem [#allocation2], %s235
        %p237 = pneg %p43
        %p238 = pneg %p40
        %p239 = pneg %p64
        %p240 = pneg %p61
        %p241 = pneg %p85
        %p242 = pneg %p82
        %p243 = pneg %p106
        %p244 = pneg %p103
        %p245 = pneg %p132
        %p246 = pneg %p129
        %s247 = sand.u32 %s119, 1
        %s248 = scalar_lea.sflag [#allocation4], %s247
        %s249 = sand.u32 %s119, 1
        %s250 = smul.addr %s249, 64
        %s251 = scalar_lea.vmem [#allocation8], %s250
        %s252 = smul.u32 16, %s22
        %s253 = smul.u32 16, %s22
        %v254 = vld [vmem:[#allocation5] sm:$0xf]
        %v255 = vld [vmem:[#allocation5 + $0x4] sm:$0xf]
        %v256 = vld [vmem:[#allocation5 + $0x8] sm:$0xf]
        %v257 = vld [vmem:[#allocation5 + $0xc] sm:$0xf]
        %v258 = vld [vmem:[#allocation5 + $0x10] sm:$0xf]
        %v259 = vld [vmem:[#allocation5 + $0x14] sm:$0xf]
        %v260 = vld [vmem:[#allocation5 + $0x18] sm:$0xf]
        %v261 = vld [vmem:[#allocation5 + $0x1c] sm:$0xf]
        %v262 = vld [vmem:[#allocation5 + $0x20] sm:$0xf]
        %v263 = vld [vmem:[#allocation5 + $0x24] sm:$0xf]
        %v264 = vld [vmem:[#allocation5 + $0x28] sm:$0xf]
        %v265 = vld [vmem:[#allocation5 + $0x2c] sm:$0xf]
        %v266 = vld [vmem:[#allocation5 + $0x30] sm:$0xf]
        %v267 = vld [vmem:[#allocation5 + $0x34] sm:$0xf]
        %v268 = vld [vmem:[#allocation5 + $0x38] sm:$0xf]
        %v269 = vld [vmem:[#allocation5 + $0x3c] sm:$0xf]
        %v270 = vld [vmem:[#allocation5 + $0x40] sm:$0xf]
        %v271 = vld [vmem:[#allocation5 + $0x44] sm:$0xf]
        %v272 = vld [vmem:[#allocation5 + $0x48] sm:$0xf]
        %v273 = vld [vmem:[#allocation5 + $0x4c] sm:$0xf]
        %v274 = vld [vmem:[#allocation5 + $0x50] sm:$0xf]
        %v275 = vld [vmem:[#allocation5 + $0x54] sm:$0xf]
        %v276 = vld [vmem:[#allocation5 + $0x58] sm:$0xf]
        %v277 = vld [vmem:[#allocation5 + $0x5c] sm:$0xf]
        %v278 = vld [vmem:[#allocation5 + $0x60] sm:$0xf]
        %v279 = vld [vmem:[#allocation5 + $0x64] sm:$0xf]
        %v280 = vld [vmem:[#allocation5 + $0x68] sm:$0xf]
        %v281 = vld [vmem:[#allocation5 + $0x6c] sm:$0xf]
        %v282 = vld [vmem:[#allocation5 + $0x70] sm:$0xf]
        %v283 = vld [vmem:[#allocation5 + $0x74] sm:$0xf]
        %v284 = vld [vmem:[#allocation5 + $0x78] sm:$0xf]
        %v285 = vld [vmem:[#allocation5 + $0x7c] sm:$0xf]
        %v286 = vld [vmem:[#allocation7] sm:$0xf]
        %v287 = vld [vmem:[#allocation7 + $0x4] sm:$0xf]
        %v288 = vld [vmem:[#allocation7 + $0x8] sm:$0xf]
        %v289 = vld [vmem:[#allocation7 + $0xc] sm:$0xf]
        %v290 = vld [vmem:[#allocation7 + $0x10] sm:$0xf]
        %v291 = vld [vmem:[#allocation7 + $0x14] sm:$0xf]
        %v292 = vld [vmem:[#allocation7 + $0x18] sm:$0xf]
        %v293 = vld [vmem:[#allocation7 + $0x1c] sm:$0xf]
        %v294 = vld [vmem:[#allocation7 + $0x20] sm:$0xf]
        %v295 = vld [vmem:[#allocation7 + $0x24] sm:$0xf]
        %v296 = vld [vmem:[#allocation7 + $0x28] sm:$0xf]
        %v297 = vld [vmem:[#allocation7 + $0x2c] sm:$0xf]
        %v298 = vld [vmem:[#allocation7 + $0x30] sm:$0xf]
        %v299 = vld [vmem:[#allocation7 + $0x34] sm:$0xf]
        %v300 = vld [vmem:[#allocation7 + $0x38] sm:$0xf]
        %v301 = vld [vmem:[#allocation7 + $0x3c] sm:$0xf]
        %v334 = vunpack.c.l.b16 %v254
        %v335 = vunpack.c.l.b16 %v255
        %v336 = vunpack.c.l.b16 %v256
        %v337 = vunpack.c.l.b16 %v257
        %v338 = vunpack.c.l.b16 %v258
        %v339 = vunpack.c.l.b16 %v259
        %v340 = vunpack.c.l.b16 %v260
        %v341 = vunpack.c.l.b16 %v261
        %v342 = vunpack.c.l.b16 %v262
        %v343 = vunpack.c.l.b16 %v263
        %v344 = vunpack.c.l.b16 %v264
        %v345 = vunpack.c.l.b16 %v265
        %v346 = vunpack.c.l.b16 %v266
        %v347 = vunpack.c.l.b16 %v267
        %v348 = vunpack.c.l.b16 %v268
        %v349 = vunpack.c.l.b16 %v269
        %v350 = vunpack.c.l.b16 %v270
        %v351 = vunpack.c.l.b16 %v271
        %v352 = vunpack.c.l.b16 %v272
        %v353 = vunpack.c.l.b16 %v273
        %v354 = vunpack.c.l.b16 %v274
        %v355 = vunpack.c.l.b16 %v275
        %v356 = vunpack.c.l.b16 %v276
        %v357 = vunpack.c.l.b16 %v277
        %v358 = vunpack.c.l.b16 %v278
        %v359 = vunpack.c.l.b16 %v279
        %v360 = vunpack.c.l.b16 %v280
        %v361 = vunpack.c.l.b16 %v281
        %v362 = vunpack.c.l.b16 %v282
        %v363 = vunpack.c.l.b16 %v283
        %v364 = vunpack.c.l.b16 %v284
        %v365 = vunpack.c.l.b16 %v285
        %v366 = vpack.c.b16 %v335, %v334
        %v367 = vpack.c.b16 %v337, %v336
        %v368 = vpack.c.b16 %v339, %v338
        %v369 = vpack.c.b16 %v341, %v340
        %v370 = vpack.c.b16 %v343, %v342
        %v371 = vpack.c.b16 %v345, %v344
        %v372 = vpack.c.b16 %v347, %v346
        %v373 = vpack.c.b16 %v349, %v348
        %v374 = vpack.c.b16 %v351, %v350
        %v375 = vpack.c.b16 %v353, %v352
        %v376 = vpack.c.b16 %v355, %v354
        %v377 = vpack.c.b16 %v357, %v356
        %v378 = vpack.c.b16 %v359, %v358
        %v379 = vpack.c.b16 %v361, %v360
        %v380 = vpack.c.b16 %v363, %v362
        %v381 = vpack.c.b16 %v365, %v364
        %v414 = vunpack.c.l.b16 %v286
        %v415 = vunpack.c.l.b16 %v287
        %v416 = vunpack.c.l.b16 %v288
        %v417 = vunpack.c.l.b16 %v289
        %v418 = vunpack.c.l.b16 %v290
        %v419 = vunpack.c.l.b16 %v291
        %v420 = vunpack.c.l.b16 %v292
        %v421 = vunpack.c.l.b16 %v293
        %v422 = vunpack.c.l.b16 %v294
        %v423 = vunpack.c.l.b16 %v295
        %v424 = vunpack.c.l.b16 %v296
        %v425 = vunpack.c.l.b16 %v297
        %v426 = vunpack.c.l.b16 %v298
        %v427 = vunpack.c.l.b16 %v299
        %v428 = vunpack.c.l.b16 %v300
        %v429 = vunpack.c.l.b16 %v301
        %v430 = vpack.c.b16 %v415, %v414
        %v431 = vpack.c.b16 %v417, %v416
        %v432 = vpack.c.b16 %v419, %v418
        %v433 = vpack.c.b16 %v421, %v420
        %v434 = vpack.c.b16 %v423, %v422
        %v435 = vpack.c.b16 %v425, %v424
        %v436 = vpack.c.b16 %v427, %v426
        %v437 = vpack.c.b16 %v429, %v428
        %446 = vmatpush.bf16.msra.mxu0 %v437
        %447 = vmatpush.bf16.msra.mxu0 %v436
        %448 = vmatpush.bf16.msra.mxu0 %v435
        %449 = vmatpush.bf16.msra.mxu0 %v434
        %450 = vmatpush.bf16.msra.mxu0 %v433
        %451 = vmatpush.bf16.msra.mxu0 %v432
        %452 = vmatpush.bf16.msra.mxu0 %v431
        %453 = vmatpush.bf16.msra.mxu0 %v430
        %454 = vmatmul.bf16.gmra.mxu0 %v366
        %v455 = vpop.f32.mrf.mxu0
        %v456 = vadd.f32 0.0, %v455
        %v457 = vpop.f32.mrf.mxu0
        %v458 = vadd.f32 0.0, %v457
        %459 = vmatmul.bf16.gmra.mxu0 %v367
        %v460 = vpop.f32.mrf.mxu0
        %v461 = vadd.f32 0.0, %v460
        %v462 = vpop.f32.mrf.mxu0
        %v463 = vadd.f32 0.0, %v462
        %464 = vmatmul.bf16.gmra.mxu0 %v368
        %v465 = vpop.f32.mrf.mxu0
        %v466 = vadd.f32 0.0, %v465
        %v467 = vpop.f32.mrf.mxu0
        %v468 = vadd.f32 0.0, %v467
        %469 = vmatmul.bf16.gmra.mxu0 %v369
        %v470 = vpop.f32.mrf.mxu0
        %v471 = vadd.f32 0.0, %v470
        %v472 = vpop.f32.mrf.mxu0
        %v473 = vadd.f32 0.0, %v472
        %474 = vmatmul.bf16.gmra.mxu0 %v370
        %v475 = vpop.f32.mrf.mxu0
        %v476 = vadd.f32 0.0, %v475
        %v477 = vpop.f32.mrf.mxu0
        %v478 = vadd.f32 0.0, %v477
        %479 = vmatmul.bf16.gmra.mxu0 %v371
        %v480 = vpop.f32.mrf.mxu0
        %v481 = vadd.f32 0.0, %v480
        %v482 = vpop.f32.mrf.mxu0
        %v483 = vadd.f32 0.0, %v482
        %484 = vmatmul.bf16.gmra.mxu0 %v372
        %v485 = vpop.f32.mrf.mxu0
        %v486 = vadd.f32 0.0, %v485
        %v487 = vpop.f32.mrf.mxu0
        %v488 = vadd.f32 0.0, %v487
        %489 = vmatmul.bf16.gmra.mxu0 %v373
        %v490 = vpop.f32.mrf.mxu0
        %v491 = vadd.f32 0.0, %v490
        %v492 = vpop.f32.mrf.mxu0
        %v493 = vadd.f32 0.0, %v492
        %494 = vmatmul.bf16.gmra.mxu0 %v374
        %v495 = vpop.f32.mrf.mxu0
        %v496 = vadd.f32 0.0, %v495
        %v497 = vpop.f32.mrf.mxu0
        %v498 = vadd.f32 0.0, %v497
        %499 = vmatmul.bf16.gmra.mxu0 %v375
        %v500 = vpop.f32.mrf.mxu0
        %v501 = vadd.f32 0.0, %v500
        %v502 = vpop.f32.mrf.mxu0
        %v503 = vadd.f32 0.0, %v502
        %504 = vmatmul.bf16.gmra.mxu0 %v376
        %v505 = vpop.f32.mrf.mxu0
        %v506 = vadd.f32 0.0, %v505
        %v507 = vpop.f32.mrf.mxu0
        %v508 = vadd.f32 0.0, %v507
        %509 = vmatmul.bf16.gmra.mxu0 %v377
        %v510 = vpop.f32.mrf.mxu0
        %v511 = vadd.f32 0.0, %v510
        %v512 = vpop.f32.mrf.mxu0
        %v513 = vadd.f32 0.0, %v512
        %514 = vmatmul.bf16.gmra.mxu0 %v378
        %v515 = vpop.f32.mrf.mxu0
        %v516 = vadd.f32 0.0, %v515
        %v517 = vpop.f32.mrf.mxu0
        %v518 = vadd.f32 0.0, %v517
        %519 = vmatmul.bf16.gmra.mxu0 %v379
        %v520 = vpop.f32.mrf.mxu0
        %v521 = vadd.f32 0.0, %v520
        %v522 = vpop.f32.mrf.mxu0
        %v523 = vadd.f32 0.0, %v522
        %524 = vmatmul.bf16.gmra.mxu0 %v380
        %v525 = vpop.f32.mrf.mxu0
        %v526 = vadd.f32 0.0, %v525
        %v527 = vpop.f32.mrf.mxu0
        %v528 = vadd.f32 0.0, %v527
        %529 = vmatmul.bf16.gmra.mxu0 %v381
        %v530 = vpop.f32.mrf.mxu0
        %v531 = vadd.f32 0.0, %v530
        %v532 = vpop.f32.mrf.mxu0
        %v533 = vadd.f32 0.0, %v532
        %534 = vdwg.mxu0
        %v535 = vpack.c.bf16 %v458, %v456
        %v536 = vpack.c.bf16 %v463, %v461
        %v537 = vpack.c.bf16 %v468, %v466
        %v538 = vpack.c.bf16 %v473, %v471
        %v539 = vpack.c.bf16 %v478, %v476
        %v540 = vpack.c.bf16 %v483, %v481
        %v541 = vpack.c.bf16 %v488, %v486
        %v542 = vpack.c.bf16 %v493, %v491
        %v543 = vpack.c.bf16 %v498, %v496
        %v544 = vpack.c.bf16 %v503, %v501
        %v545 = vpack.c.bf16 %v508, %v506
        %v546 = vpack.c.bf16 %v513, %v511
        %v547 = vpack.c.bf16 %v518, %v516
        %v548 = vpack.c.bf16 %v523, %v521
        %v549 = vpack.c.bf16 %v528, %v526
        %v550 = vpack.c.bf16 %v533, %v531
        %v551 = vld [vmem:[%s216] sm:$0xff]
        %v552 = vld [vmem:[%s216 + $0x8] sm:$0xff]
        %v553 = vld [vmem:[%s216 + $0x10] sm:$0xff]
        %v554 = vld [vmem:[%s216 + $0x18] sm:$0xff]
        %v555 = vld [vmem:[%s216 + $0x20] sm:$0xff]
        %v556 = vld [vmem:[%s216 + $0x28] sm:$0xff]
        %v557 = vld [vmem:[%s216 + $0x30] sm:$0xff]
        %v558 = vld [vmem:[%s216 + $0x38] sm:$0xff]
        %v559 = vld [vmem:[%s216 + $0x40] sm:$0xff]
        %v560 = vld [vmem:[%s216 + $0x48] sm:$0xff]
        %v561 = vld [vmem:[%s216 + $0x50] sm:$0xff]
        %v562 = vld [vmem:[%s216 + $0x58] sm:$0xff]
        %v563 = vld [vmem:[%s216 + $0x60] sm:$0xff]
        %v564 = vld [vmem:[%s216 + $0x68] sm:$0xff]
        %v565 = vld [vmem:[%s216 + $0x70] sm:$0xff]
        %v566 = vld [vmem:[%s216 + $0x78] sm:$0xff]
        %v567 = vld [vmem:[%s3] sm:$0x1]
        %v569 = vperm.slane %v567, 0
        %v587 = vunpack.c.l.b16 %v551
        %v588 = vunpack.c.h.b16 %v551
        %v589 = vunpack.c.l.b16 %v552
        %v590 = vunpack.c.h.b16 %v552
        %v591 = vunpack.c.l.b16 %v553
        %v592 = vunpack.c.h.b16 %v553
        %v593 = vunpack.c.l.b16 %v554
        %v594 = vunpack.c.h.b16 %v554
        %v595 = vunpack.c.l.b16 %v555
        %v596 = vunpack.c.h.b16 %v555
        %v597 = vunpack.c.l.b16 %v556
        %v598 = vunpack.c.h.b16 %v556
        %v599 = vunpack.c.l.b16 %v557
        %v600 = vunpack.c.h.b16 %v557
        %v601 = vunpack.c.l.b16 %v558
        %v602 = vunpack.c.h.b16 %v558
        %v603 = vunpack.c.l.b16 %v559
        %v604 = vunpack.c.h.b16 %v559
        %v605 = vunpack.c.l.b16 %v560
        %v606 = vunpack.c.h.b16 %v560
        %v607 = vunpack.c.l.b16 %v561
        %v608 = vunpack.c.h.b16 %v561
        %v609 = vunpack.c.l.b16 %v562
        %v610 = vunpack.c.h.b16 %v562
        %v611 = vunpack.c.l.b16 %v563
        %v612 = vunpack.c.h.b16 %v563
        %v613 = vunpack.c.l.b16 %v564
        %v614 = vunpack.c.h.b16 %v564
        %v615 = vunpack.c.l.b16 %v565
        %v616 = vunpack.c.h.b16 %v565
        %v617 = vunpack.c.l.b16 %v566
        %v618 = vunpack.c.h.b16 %v566
        %v619 = vpack.c.b16 %v589, %v587
        %v620 = vpack.c.b16 %v590, %v588
        %v621 = vpack.c.b16 %v593, %v591
        %v622 = vpack.c.b16 %v594, %v592
        %v623 = vpack.c.b16 %v597, %v595
        %v624 = vpack.c.b16 %v598, %v596
        %v625 = vpack.c.b16 %v601, %v599
        %v626 = vpack.c.b16 %v602, %v600
        %v627 = vpack.c.b16 %v605, %v603
        %v628 = vpack.c.b16 %v606, %v604
        %v629 = vpack.c.b16 %v609, %v607
        %v630 = vpack.c.b16 %v610, %v608
        %v631 = vpack.c.b16 %v613, %v611
        %v632 = vpack.c.b16 %v614, %v612
        %v633 = vpack.c.b16 %v617, %v615
        %v634 = vpack.c.b16 %v618, %v616
        %651 = vmatpush.bf16.msra.mxu0 %v542
        %652 = vmatpush.bf16.msra.mxu0 %v541
        %653 = vmatpush.bf16.msra.mxu0 %v540
        %654 = vmatpush.bf16.msra.mxu0 %v539
        %655 = vmatpush.bf16.msra.mxu0 %v538
        %656 = vmatpush.bf16.msra.mxu0 %v537
        %657 = vmatpush.bf16.msra.mxu0 %v536
        %658 = vmatpush.bf16.msra.mxu0 %v535
        %659 = vmatmul.bf16.gmra.mxu0 %v619
        %v660 = vpop.f32.mrf.mxu0
        %v661 = vadd.f32 %v569, %v660
        %v662 = vpop.f32.mrf.mxu0
        %v663 = vadd.f32 %v569, %v662
        %664 = vmatmul.bf16.gmra.mxu0 %v621
        %v665 = vpop.f32.mrf.mxu0
        %v666 = vadd.f32 %v569, %v665
        %v667 = vpop.f32.mrf.mxu0
        %v668 = vadd.f32 %v569, %v667
        %669 = vmatmul.bf16.gmra.mxu0 %v623
        %v670 = vpop.f32.mrf.mxu0
        %v671 = vadd.f32 %v569, %v670
        %v672 = vpop.f32.mrf.mxu0
        %v673 = vadd.f32 %v569, %v672
        %674 = vmatmul.bf16.gmra.mxu0 %v625
        %v675 = vpop.f32.mrf.mxu0
        %v676 = vadd.f32 %v569, %v675
        %v677 = vpop.f32.mrf.mxu0
        %v678 = vadd.f32 %v569, %v677
        %679 = vmatmul.bf16.gmra.mxu0 %v627
        %v680 = vpop.f32.mrf.mxu0
        %v681 = vadd.f32 %v569, %v680
        %v682 = vpop.f32.mrf.mxu0
        %v683 = vadd.f32 %v569, %v682
        %684 = vmatmul.bf16.gmra.mxu0 %v629
        %v685 = vpop.f32.mrf.mxu0
        %v686 = vadd.f32 %v569, %v685
        %v687 = vpop.f32.mrf.mxu0
        %v688 = vadd.f32 %v569, %v687
        %689 = vmatmul.bf16.gmra.mxu0 %v631
        %v690 = vpop.f32.mrf.mxu0
        %v691 = vadd.f32 %v569, %v690
        %v692 = vpop.f32.mrf.mxu0
        %v693 = vadd.f32 %v569, %v692
        %694 = vmatmul.bf16.gmra.mxu0 %v633
        %v695 = vpop.f32.mrf.mxu0
        %v696 = vadd.f32 %v569, %v695
        %v697 = vpop.f32.mrf.mxu0
        %v698 = vadd.f32 %v569, %v697
        %699 = vdwg.mxu0
        %700 = vmatpush.bf16.msra.mxu0 %v550
        %701 = vmatpush.bf16.msra.mxu0 %v549
        %702 = vmatpush.bf16.msra.mxu0 %v548
        %703 = vmatpush.bf16.msra.mxu0 %v547
        %704 = vmatpush.bf16.msra.mxu0 %v546
        %705 = vmatpush.bf16.msra.mxu0 %v545
        %706 = vmatpush.bf16.msra.mxu0 %v544
        %707 = vmatpush.bf16.msra.mxu0 %v543
        %708 = vmatmul.bf16.gmra.mxu0 %v620
        %v709 = vpop.f32.mrf.mxu0
        %v710 = vadd.f32 %v661, %v709
        %v711 = vpop.f32.mrf.mxu0
        %v712 = vadd.f32 %v663, %v711
        %713 = vmatmul.bf16.gmra.mxu0 %v622
        %v714 = vpop.f32.mrf.mxu0
        %v715 = vadd.f32 %v666, %v714
        %v716 = vpop.f32.mrf.mxu0
        %v717 = vadd.f32 %v668, %v716
        %718 = vmatmul.bf16.gmra.mxu0 %v624
        %v719 = vpop.f32.mrf.mxu0
        %v720 = vadd.f32 %v671, %v719
        %v721 = vpop.f32.mrf.mxu0
        %v722 = vadd.f32 %v673, %v721
        %723 = vmatmul.bf16.gmra.mxu0 %v626
        %v724 = vpop.f32.mrf.mxu0
        %v725 = vadd.f32 %v676, %v724
        %v726 = vpop.f32.mrf.mxu0
        %v727 = vadd.f32 %v678, %v726
        %728 = vmatmul.bf16.gmra.mxu0 %v628
        %v729 = vpop.f32.mrf.mxu0
        %v730 = vadd.f32 %v681, %v729
        %v731 = vpop.f32.mrf.mxu0
        %v732 = vadd.f32 %v683, %v731
        %733 = vmatmul.bf16.gmra.mxu0 %v630
        %v734 = vpop.f32.mrf.mxu0
        %v735 = vadd.f32 %v686, %v734
        %v736 = vpop.f32.mrf.mxu0
        %v737 = vadd.f32 %v688, %v736
        %738 = vmatmul.bf16.gmra.mxu0 %v632
        %v739 = vpop.f32.mrf.mxu0
        %v740 = vadd.f32 %v691, %v739
        %v741 = vpop.f32.mrf.mxu0
        %v742 = vadd.f32 %v693, %v741
        %743 = vmatmul.bf16.gmra.mxu0 %v634
        %v744 = vpop.f32.mrf.mxu0
        %v745 = vadd.f32 %v696, %v744
        %v746 = vpop.f32.mrf.mxu0
        %v747 = vadd.f32 %v698, %v746
        %748 = vdwg.mxu0
        %v749 = vmax.f32 %v710, 0.0
        %v750 = vmax.f32 %v712, 0.0
        %v751 = vmax.f32 %v715, 0.0
        %v752 = vmax.f32 %v717, 0.0
        %v753 = vmax.f32 %v720, 0.0
        %v754 = vmax.f32 %v722, 0.0
        %v755 = vmax.f32 %v725, 0.0
        %v756 = vmax.f32 %v727, 0.0
        %v757 = vmax.f32 %v730, 0.0
        %v758 = vmax.f32 %v732, 0.0
        %v759 = vmax.f32 %v735, 0.0
        %v760 = vmax.f32 %v737, 0.0
        %v761 = vmax.f32 %v740, 0.0
        %v762 = vmax.f32 %v742, 0.0
        %v763 = vmax.f32 %v745, 0.0
        %v764 = vmax.f32 %v747, 0.0
        %v765 = vpack.c.bf16 %v749, %v749
        %v766 = vpack.c.bf16 %v750, %v750
        %v767 = vpack.c.bf16 %v751, %v751
        %v768 = vpack.c.bf16 %v752, %v752
        %v769 = vpack.c.bf16 %v753, %v753
        %v770 = vpack.c.bf16 %v754, %v754
        %v771 = vpack.c.bf16 %v755, %v755
        %v772 = vpack.c.bf16 %v756, %v756
        %v773 = vpack.c.bf16 %v757, %v757
        %v774 = vpack.c.bf16 %v758, %v758
        %v775 = vpack.c.bf16 %v759, %v759
        %v776 = vpack.c.bf16 %v760, %v760
        %v777 = vpack.c.bf16 %v761, %v761
        %v778 = vpack.c.bf16 %v762, %v762
        %v779 = vpack.c.bf16 %v763, %v763
        %v780 = vpack.c.bf16 %v764, %v764
        %781 = vst [vmem:[%s251] sm:$0xf] %v765
        %782 = vst [vmem:[%s251 + $0x4] sm:$0xf] %v766
        %783 = vst [vmem:[%s251 + $0x8] sm:$0xf] %v767
        %784 = vst [vmem:[%s251 + $0xc] sm:$0xf] %v768
        %785 = vst [vmem:[%s251 + $0x10] sm:$0xf] %v769
        %786 = vst [vmem:[%s251 + $0x14] sm:$0xf] %v770
        %787 = vst [vmem:[%s251 + $0x18] sm:$0xf] %v771
        %788 = vst [vmem:[%s251 + $0x1c] sm:$0xf] %v772
        %789 = vst [vmem:[%s251 + $0x20] sm:$0xf] %v773
        %790 = vst [vmem:[%s251 + $0x24] sm:$0xf] %v774
        %791 = vst [vmem:[%s251 + $0x28] sm:$0xf] %v775
        %792 = vst [vmem:[%s251 + $0x2c] sm:$0xf] %v776
        %793 = vst [vmem:[%s251 + $0x30] sm:$0xf] %v777
        %794 = vst [vmem:[%s251 + $0x34] sm:$0xf] %v778
        %795 = vst [vmem:[%s251 + $0x38] sm:$0xf] %v779
        %796 = vst [vmem:[%s251 + $0x3c] sm:$0xf] %v780
        %s797 = sand.u32 %s119, 1
        %s798 = scalar_lea.sflag [#allocation4], %s797
        %s799 = sand.u32 %s119, 1
        %s800 = smul.addr %s799, 64
        %s801 = scalar_lea.vmem [#allocation8], %s800
        // Predicated region
        $region49: #{tpu_custom_call.1} parent=35 // pred_check
          %p802 = pneg %p129
        $region50: #{tpu_custom_call.1} parent=35 // pred_check_branch
          %804 = sbr.rel (%p802) target = $region52
        $region51: #{tpu_custom_call.1} parent=35 // pred_region
          %s805 = smul.u32 16, %s22
          %807 = vsyncadd %s798, 0
          %s808 = smul.addr %s805, 4
          %s809 = scalar_lea.hbm %s4, %s808
          %s810 = sshll.u32 %s801, 4
          %s811 = int_to_ptr.vmem [resolvable:$true] %s810
          %s812 = sshll.u32 %s809, 4
          %s813 = int_to_ptr.hbm [resolvable:$true] %s812
          %818 = dma.vmem_to_hbm [thread:$0]  %s811, 1024, %s813, %s798, 64, 64, 4
        $region52: #{tpu_custom_call.1} parent=35 // pred_fallthru
          _
      $region36: #{tpu_custom_call.1} parent=5 // pred_fallthru
        _
      %p819 = scmp.le.s32.totalorder 2, %s17
      // Predicated region
      $region53: #{tpu_custom_call.1} parent=5 // pred_check
        %p820 = pneg %p819
      $region54: #{tpu_custom_call.1} parent=5 // pred_check_branch
        %822 = sbr.rel (%p820) target = $region56
      $region55: #{tpu_custom_call.1} parent=5 // pred_region
        %s823 = ssub.s32 %s17, 2
        // Predicated region
        $region57: #{tpu_custom_call.1} parent=55 // pred_check
          %p824 = pneg %p135
        $region58: #{tpu_custom_call.1} parent=55 // pred_check_branch
          %826 = sbr.rel (%p824) target = $region60
        $region59: #{tpu_custom_call.1} parent=55 // pred_region
          %s827 = sand.u32 %s120, 1
          %s828 = scalar_lea.sflag [#allocation4], %s827
          %s829 = sand.u32 %s120, 1
          %s830 = smul.addr %s829, 64
          %s831 = scalar_lea.vmem [#allocation8], %s830
          %833 = dma.done %s828, 1024
        $region60: #{tpu_custom_call.1} parent=55 // pred_fallthru
          _
      $region56: #{tpu_custom_call.1} parent=5 // pred_fallthru
        _
    $region6: #{tpu_custom_call.1} parent=1 // loop_footer
      %s21 = sadd.s32 1, %s17
    $region7: #{tpu_custom_call.1} parent=1 // loop_footer_branch
      %16 = sbr.rel target = $region3
    $region8: #{tpu_custom_call.1} parent=1 // loop_exit
      _
    %834 = vsyncpa [#allocation3], 1
    %s835 = scalar_lea.sflag [#allocation3], 1
    %836 = vsyncpa %s835, 1
    %837 = vsyncpa [#allocation6], 1
    %838 = vsyncpa [#allocation4], 1
    %s839 = scalar_lea.sflag [#allocation4], 1
    %840 = vsyncpa %s839, 1

</llo_original>
